<compile_context>
chip_gen: v5e
topology: v5e:2x2
jax: 0.10.0
libtpu: 0.0.40
codegen_flags: <defaults>
</compile_context>

<pallas_src>
import functools

import jax
import jax.numpy as jnp
from jax.experimental import pallas as pl
from jax.experimental.pallas import tpu as pltpu

EPS = 1e-5  # nn.LayerNorm default eps


def _round_up(v, m):
    return ((v + m - 1) // m) * m


def _patch_embed_kernel(x_ref, wblk_ref, p_ref, s1_ref, s1t_ref, s2_ref, s2t_ref,
                        o_ref, *, mxu_dtype):
    # x_ref   : [tp, G*patch_dim]   packed patch rows (G patches per slab row)
    # wblk_ref: [G*patch_dim, G*d_model]  block-diagonal (gamma1-folded) weight
    # p_ref   : [3, G*d_model]      rows: (bias_eff tiled, gamma2 tiled, beta2 tiled)
    # s1_ref  : [G*patch_dim, Gp]   segment-mean matrix (entries 1/patch_dim)
    # s1t_ref : [Gp, G*patch_dim]   segment-broadcast matrix (entries 1)
    # s2_ref  : [G*d_model, Gp]     segment-mean matrix (entries 1/d_model)
    # s2t_ref : [Gp, G*d_model]     segment-broadcast matrix (entries 1)
    # o_ref   : [tp, G*d_model]     lane-dense output slab (128 lanes for d_model=32)

    x = x_ref[...].astype(jnp.float32)

    # ---- LayerNorm 1 over each patch_dim segment (stats via segment matmuls) ----
    mu = jnp.dot(x, s1_ref[...], preferred_element_type=jnp.float32)        # [tp, Gp]
    ex2 = jnp.dot(x * x, s1_ref[...], preferred_element_type=jnp.float32)   # [tp, Gp]
    mu_b = jnp.dot(mu, s1t_ref[...], preferred_element_type=jnp.float32)    # [tp, G*pd]
    ex2_b = jnp.dot(ex2, s1t_ref[...], preferred_element_type=jnp.float32)  # [tp, G*pd]
    var = ex2_b - mu_b * mu_b
    xn = (x - mu_b) * jax.lax.rsqrt(var + EPS)       # gamma1/beta1 folded into W/bias

    # ---- Linear: one block-diagonal matmul, fully 128-lane dense ----
    y = jnp.dot(xn.astype(mxu_dtype), wblk_ref[...].astype(mxu_dtype),
                preferred_element_type=jnp.float32) + p_ref[0:1, :]         # [tp, G*dm]

    # ---- LayerNorm 2 over each d_model segment ----
    mu2 = jnp.dot(y, s2_ref[...], preferred_element_type=jnp.float32)
    ey2 = jnp.dot(y * y, s2_ref[...], preferred_element_type=jnp.float32)
    mu2_b = jnp.dot(mu2, s2t_ref[...], preferred_element_type=jnp.float32)
    ey2_b = jnp.dot(ey2, s2t_ref[...], preferred_element_type=jnp.float32)
    var2 = ey2_b - mu2_b * mu2_b
    out = (y - mu2_b) * jax.lax.rsqrt(var2 + EPS) * p_ref[1:2, :] + p_ref[2:3, :]

    o_ref[...] = out.astype(o_ref.dtype)


@functools.partial(jax.jit, static_argnames=("n_samples_per_patch", "patch_size"))
def patch_embedding(x, params, *, n_samples_per_patch, patch_size):
    """x: [B, C, H, W] with H = nph*ph, W = npw*pw (matches the PyTorch reshape)."""
    nph, npw = n_samples_per_patch
    ph, pw = patch_size
    B, C, H, W = x.shape
    assert H == nph * ph and W == npw * pw

    g1, b1, w_lin, bias, g2, b2 = params
    patch_dim = C * ph * pw
    d_model = w_lin.shape[1]
    n_patches = nph * npw
    M = B * n_patches

    # ---- patchify exactly like the PyTorch forward (layout glue; candidate for
    #      fusion into the Pallas x operand via allow_input_fusion) ----
    xp = x.reshape(B, C, nph, ph, npw, pw)
    xp = jnp.transpose(xp, (0, 2, 4, 1, 3, 5))          # [B, nph, npw, C, ph, pw]
    xrows = xp.reshape(M, patch_dim)                    # [M, patch_dim]

    # ---- lane packing: G patch rows per slab row -> 128-lane-dense output ----
    if d_model < 128 and 128 % d_model == 0:
        G = 128 // d_model
    else:
        G = 1
    Gp = max(8, G)                                      # padded segment-count axis

    rows_packed = -(-M // G)                            # ceil(M / G)
    if rows_packed > 8:
        tp = _round_up(-(-rows_packed // 2), 8)         # aim for >= 2 grid steps
    else:
        tp = 8
    tp = max(8, min(tp, 256))                           # cap packed rows per tile
    rows_pp = _round_up(rows_packed, tp)
    num_tiles = rows_pp // tp
    Mp = rows_pp * G
    if Mp != M:
        xrows = jnp.pad(xrows, ((0, Mp - M), (0, 0)))   # zero rows; sliced off below
    xpack = xrows.reshape(rows_pp, G * patch_dim)       # free row-major reshape

    lanes_in = G * patch_dim
    lanes_out = G * d_model

    # ---- fold LN1 gamma/beta into the linear; build block-diagonal weight ----
    g1f = g1.astype(jnp.float32)
    b1f = b1.astype(jnp.float32)
    wf = w_lin.astype(jnp.float32)
    w1 = g1f[:, None] * wf                                      # [pd, dm]
    w_blk = jnp.kron(jnp.eye(G, dtype=jnp.float32), w1)         # [G*pd, G*dm]
    bias_eff = b1f @ wf + bias.astype(jnp.float32)              # [dm]
    p = jnp.stack([jnp.tile(bias_eff, G),
                   jnp.tile(g2.astype(jnp.float32), G),
                   jnp.tile(b2.astype(jnp.float32), G)])        # [3, G*dm]

    # ---- segment-sum / segment-broadcast matrices for the grouped LayerNorms ----
    seg1 = jnp.arange(lanes_in) // patch_dim
    s1 = (seg1[:, None] == jnp.arange(Gp)[None, :]).astype(jnp.float32) / patch_dim
    s1t = (jnp.arange(Gp)[:, None] == seg1[None, :]).astype(jnp.float32)
    seg2 = jnp.arange(lanes_out) // d_model
    s2 = (seg2[:, None] == jnp.arange(Gp)[None, :]).astype(jnp.float32) / d_model
    s2t = (jnp.arange(Gp)[:, None] == seg2[None, :]).astype(jnp.float32)

    mxu_dtype = jnp.bfloat16 if x.dtype == jnp.bfloat16 else jnp.float32

    # VMEM budget: double-buffered x/out blocks + resident weight/params + headroom.
    blk_bytes = 2 * tp * (lanes_in + lanes_out) * 4
    resident = (lanes_in * lanes_out + 3 * lanes_out
                + 2 * Gp * (lanes_in + lanes_out)) * 4 * 2
    vmem_limit = int(min(32 * 1024 * 1024,
                         max(8 * 1024 * 1024, 4 * (blk_bytes + resident))))

    kern = functools.partial(_patch_embed_kernel, mxu_dtype=mxu_dtype)

    out = pl.pallas_call(
        kern,
        out_shape=jax.ShapeDtypeStruct((rows_pp, lanes_out), x.dtype),
        grid_spec=pltpu.PrefetchScalarGridSpec(
            num_scalar_prefetch=0,
            grid=(num_tiles,),
            in_specs=[
                pl.BlockSpec((tp, lanes_in), lambda i: (i, 0)),        # packed x rows
                pl.BlockSpec((lanes_in, lanes_out), lambda i: (0, 0)), # block-diag W
                pl.BlockSpec((3, lanes_out), lambda i: (0, 0)),        # bias/g2/b2
                pl.BlockSpec((lanes_in, Gp), lambda i: (0, 0)),        # seg-mean 1
                pl.BlockSpec((Gp, lanes_in), lambda i: (0, 0)),        # seg-bcast 1
                pl.BlockSpec((lanes_out, Gp), lambda i: (0, 0)),       # seg-mean 2
                pl.BlockSpec((Gp, lanes_out), lambda i: (0, 0)),       # seg-bcast 2
            ],
            out_specs=pl.BlockSpec((tp, lanes_out), lambda i: (i, 0)),
        ),
        compiler_params=pltpu.CompilerParams(
            dimension_semantics=("parallel",),
            vmem_limit_bytes=vmem_limit,
            allow_input_fusion=[True] + [False] * 6,
        ),
    )(xpack, w_blk, p, s1, s1t, s2, s2t)

    out = out.reshape(rows_pp * G, d_model)[:M]         # free un-pack + drop padding
    return out.reshape(B, n_patches, d_model)


def _reference(x, params, *, n_samples_per_patch, patch_size):
    nph, npw = n_samples_per_patch
    ph, pw = patch_size
    B, C, H, W = x.shape
    g1, b1, w_lin, bias, g2, b2 = params
    xp = x.reshape(B, C, nph, ph, npw, pw)
    xp = jnp.transpose(xp, (0, 2, 4, 1, 3, 5)).reshape(B, nph * npw, C * ph * pw)
    xp = xp.astype(jnp.float32)

    def ln(v, g, b):
        mu = jnp.mean(v, axis=-1, keepdims=True)
        var = jnp.mean((v - mu) ** 2, axis=-1, keepdims=True)
        return (v - mu) * jax.lax.rsqrt(var + EPS) * g + b

    h = ln(xp, g1, b1)
    h = h @ w_lin + bias
    h = ln(h, g2, b2)
    return h.astype(x.dtype)


if __name__ == "__main__":
    # Module config: n_samples_per_patch=(4,4), patch_size=(4,4), d_model=32, C=4
    n_samples_per_patch = (4, 4)
    patch_size = (4, 4)
    d_model = 32
    C = 4
    H = n_samples_per_patch[0] * patch_size[0]          # 16
    W = n_samples_per_patch[1] * patch_size[1]          # 16
    patch_dim = C * patch_size[0] * patch_size[1]       # 64

    key = jax.random.PRNGKey(0)
    kx, kw, kb, kg1, kb1, kg2, kb2 = jax.random.split(key, 7)

    g1 = 1.0 + 0.1 * jax.random.normal(kg1, (patch_dim,), jnp.float32)
    b1 = 0.1 * jax.random.normal(kb1, (patch_dim,), jnp.float32)
    w_lin = jax.random.normal(kw, (patch_dim, d_model), jnp.float32) * 0.02
    bias = jax.random.normal(kb, (d_model,), jnp.float32) * 0.02
    g2 = 1.0 + 0.1 * jax.random.normal(kg2, (d_model,), jnp.float32)
    b2 = 0.1 * jax.random.normal(kb2, (d_model,), jnp.float32)
    params = (g1, b1, w_lin, bias, g2, b2)

    # B=2: spec toy size (single grid step).  B=6: exercises row padding and a
    # 2-step "parallel" grid (tiled pipeline path).
    for B in (2, 6):
        x = jax.random.normal(jax.random.fold_in(kx, B), (B, C, H, W),
                              dtype=jnp.float32)
        out = patch_embedding(x, params,
                              n_samples_per_patch=n_samples_per_patch,
                              patch_size=patch_size)
        out = jax.block_until_ready(out)
        ref = _reference(x, params,
                         n_samples_per_patch=n_samples_per_patch,
                         patch_size=patch_size)
        assert out.shape == (B, 16, d_model)
        assert jnp.allclose(out, ref, atol=3e-4, rtol=3e-4), \
            float(jnp.max(jnp.abs(out - ref)))
    print("KERNEL_OK")
</pallas_src>

<mosaic_0001>
module attributes {stable_mosaic.version = 11 : i64} {
  func.func @_patch_embed_kernel(%arg0: i32, %arg1: memref<8x256xf32, #tpu.memory_space<vmem>>, %arg2: memref<256x128xf32, #tpu.memory_space<vmem>>, %arg3: memref<3x128xf32, #tpu.memory_space<vmem>>, %arg4: memref<256x8xf32, #tpu.memory_space<vmem>>, %arg5: memref<8x256xf32, #tpu.memory_space<vmem>>, %arg6: memref<128x8xf32, #tpu.memory_space<vmem>>, %arg7: memref<8x128xf32, #tpu.memory_space<vmem>>, %arg8: memref<8x128xf32, #tpu.memory_space<vmem>>) attributes {dimension_semantics = [#tpu.dimension_semantics<parallel>], iteration_bounds = array<i64: 1>, scalar_prefetch = 0 : i64, scratch_operands = 0 : i64, tpu.core_type = #tpu.core_type<tc>, window_params = [{transform_indices = @transform_0, window_bounds = array<i64: 8, 256>}, {pipeline_mode = #tpu.pipeline_mode<synchronous>, transform_indices = @transform_1, window_bounds = array<i64: 256, 128>}, {pipeline_mode = #tpu.pipeline_mode<synchronous>, transform_indices = @transform_2, window_bounds = array<i64: 3, 128>}, {pipeline_mode = #tpu.pipeline_mode<synchronous>, transform_indices = @transform_3, window_bounds = array<i64: 256, 8>}, {pipeline_mode = #tpu.pipeline_mode<synchronous>, transform_indices = @transform_4, window_bounds = array<i64: 8, 256>}, {pipeline_mode = #tpu.pipeline_mode<synchronous>, transform_indices = @transform_5, window_bounds = array<i64: 128, 8>}, {pipeline_mode = #tpu.pipeline_mode<synchronous>, transform_indices = @transform_6, window_bounds = array<i64: 8, 128>}, {transform_indices = @transform_7, window_bounds = array<i64: 8, 128>}]} {
    %c0 = arith.constant 0 : index
    %c0_0 = arith.constant 0 : index
    %0 = vector.load %arg1[%c0, %c0_0] : memref<8x256xf32, #tpu.memory_space<vmem>>, vector<8x256xf32>
    %c0_1 = arith.constant 0 : index
    %c0_2 = arith.constant 0 : index
    %1 = vector.load %arg4[%c0_1, %c0_2] : memref<256x8xf32, #tpu.memory_space<vmem>>, vector<256x8xf32>
    %cst = arith.constant dense<0.000000e+00> : vector<8x8xf32>
    %2 = tpu.matmul %0, %1, %cst {dimension_numbers = #tpu.dot_dimension_numbers<[1], [0], [0], [1], [0, 0, 1, 1], [], []>} : vector<8x256xf32>, vector<256x8xf32>, vector<8x8xf32> -> vector<8x8xf32>
    %3 = arith.mulf %0, %0 : vector<8x256xf32>
    %c0_3 = arith.constant 0 : index
    %c0_4 = arith.constant 0 : index
    %4 = vector.load %arg4[%c0_3, %c0_4] : memref<256x8xf32, #tpu.memory_space<vmem>>, vector<256x8xf32>
    %cst_5 = arith.constant dense<0.000000e+00> : vector<8x8xf32>
    %5 = tpu.matmul %3, %4, %cst_5 {dimension_numbers = #tpu.dot_dimension_numbers<[1], [0], [0], [1], [0, 0, 1, 1], [], []>} : vector<8x256xf32>, vector<256x8xf32>, vector<8x8xf32> -> vector<8x8xf32>
    %c0_6 = arith.constant 0 : index
    %c0_7 = arith.constant 0 : index
    %6 = vector.load %arg5[%c0_6, %c0_7] : memref<8x256xf32, #tpu.memory_space<vmem>>, vector<8x256xf32>
    %cst_8 = arith.constant dense<0.000000e+00> : vector<8x256xf32>
    %7 = tpu.matmul %2, %6, %cst_8 {dimension_numbers = #tpu.dot_dimension_numbers<[1], [0], [0], [1], [0, 0, 1, 1], [], []>} : vector<8x8xf32>, vector<8x256xf32>, vector<8x256xf32> -> vector<8x256xf32>
    %c0_9 = arith.constant 0 : index
    %c0_10 = arith.constant 0 : index
    %8 = vector.load %arg5[%c0_9, %c0_10] : memref<8x256xf32, #tpu.memory_space<vmem>>, vector<8x256xf32>
    %cst_11 = arith.constant dense<0.000000e+00> : vector<8x256xf32>
    %9 = tpu.matmul %5, %8, %cst_11 {dimension_numbers = #tpu.dot_dimension_numbers<[1], [0], [0], [1], [0, 0, 1, 1], [], []>} : vector<8x8xf32>, vector<8x256xf32>, vector<8x256xf32> -> vector<8x256xf32>
    %10 = arith.mulf %7, %7 : vector<8x256xf32>
    %11 = arith.subf %9, %10 : vector<8x256xf32>
    %12 = arith.subf %0, %7 : vector<8x256xf32>
    %cst_12 = arith.constant 9.99999974E-6 : f32
    %13 = vector.broadcast %cst_12 : f32 to vector<8x256xf32>
    %14 = arith.addf %11, %13 : vector<8x256xf32>
    %15 = math.rsqrt %14 : vector<8x256xf32>
    %16 = arith.mulf %12, %15 : vector<8x256xf32>
    %c0_13 = arith.constant 0 : index
    %c0_14 = arith.constant 0 : index
    %17 = vector.load %arg2[%c0_13, %c0_14] : memref<256x128xf32, #tpu.memory_space<vmem>>, vector<256x128xf32>
    %cst_15 = arith.constant dense<0.000000e+00> : vector<8x128xf32>
    %18 = tpu.matmul %16, %17, %cst_15 {dimension_numbers = #tpu.dot_dimension_numbers<[1], [0], [0], [1], [0, 0, 1, 1], [], []>} : vector<8x256xf32>, vector<256x128xf32>, vector<8x128xf32> -> vector<8x128xf32>
    %c0_16 = arith.constant 0 : index
    %c0_17 = arith.constant 0 : index
    %19 = vector.load %arg3[%c0_16, %c0_17] : memref<3x128xf32, #tpu.memory_space<vmem>>, vector<1x128xf32>
    %20 = vector.broadcast %19 : vector<1x128xf32> to vector<8x128xf32>
    %21 = arith.addf %18, %20 : vector<8x128xf32>
    %c0_18 = arith.constant 0 : index
    %c0_19 = arith.constant 0 : index
    %22 = vector.load %arg6[%c0_18, %c0_19] : memref<128x8xf32, #tpu.memory_space<vmem>>, vector<128x8xf32>
    %cst_20 = arith.constant dense<0.000000e+00> : vector<8x8xf32>
    %23 = tpu.matmul %21, %22, %cst_20 {dimension_numbers = #tpu.dot_dimension_numbers<[1], [0], [0], [1], [0, 0, 1, 1], [], []>} : vector<8x128xf32>, vector<128x8xf32>, vector<8x8xf32> -> vector<8x8xf32>
    %24 = arith.mulf %21, %21 : vector<8x128xf32>
    %c0_21 = arith.constant 0 : index
    %c0_22 = arith.constant 0 : index
    %25 = vector.load %arg6[%c0_21, %c0_22] : memref<128x8xf32, #tpu.memory_space<vmem>>, vector<128x8xf32>
    %cst_23 = arith.constant dense<0.000000e+00> : vector<8x8xf32>
    %26 = tpu.matmul %24, %25, %cst_23 {dimension_numbers = #tpu.dot_dimension_numbers<[1], [0], [0], [1], [0, 0, 1, 1], [], []>} : vector<8x128xf32>, vector<128x8xf32>, vector<8x8xf32> -> vector<8x8xf32>
    %c0_24 = arith.constant 0 : index
    %c0_25 = arith.constant 0 : index
    %27 = vector.load %arg7[%c0_24, %c0_25] : memref<8x128xf32, #tpu.memory_space<vmem>>, vector<8x128xf32>
    %cst_26 = arith.constant dense<0.000000e+00> : vector<8x128xf32>
    %28 = tpu.matmul %23, %27, %cst_26 {dimension_numbers = #tpu.dot_dimension_numbers<[1], [0], [0], [1], [0, 0, 1, 1], [], []>} : vector<8x8xf32>, vector<8x128xf32>, vector<8x128xf32> -> vector<8x128xf32>
    %c0_27 = arith.constant 0 : index
    %c0_28 = arith.constant 0 : index
    %29 = vector.load %arg7[%c0_27, %c0_28] : memref<8x128xf32, #tpu.memory_space<vmem>>, vector<8x128xf32>
    %cst_29 = arith.constant dense<0.000000e+00> : vector<8x128xf32>
    %30 = tpu.matmul %26, %29, %cst_29 {dimension_numbers = #tpu.dot_dimension_numbers<[1], [0], [0], [1], [0, 0, 1, 1], [], []>} : vector<8x8xf32>, vector<8x128xf32>, vector<8x128xf32> -> vector<8x128xf32>
    %31 = arith.mulf %28, %28 : vector<8x128xf32>
    %32 = arith.subf %30, %31 : vector<8x128xf32>
    %33 = arith.subf %21, %28 : vector<8x128xf32>
    %cst_30 = arith.constant 9.99999974E-6 : f32
    %34 = vector.broadcast %cst_30 : f32 to vector<8x128xf32>
    %35 = arith.addf %32, %34 : vector<8x128xf32>
    %36 = math.rsqrt %35 : vector<8x128xf32>
    %37 = arith.mulf %33, %36 : vector<8x128xf32>
    %c1 = arith.constant 1 : index
    %c0_31 = arith.constant 0 : index
    %38 = vector.load %arg3[%c1, %c0_31] : memref<3x128xf32, #tpu.memory_space<vmem>>, vector<1x128xf32>
    %39 = vector.broadcast %38 : vector<1x128xf32> to vector<8x128xf32>
    %40 = arith.mulf %37, %39 : vector<8x128xf32>
    %c2 = arith.constant 2 : index
    %c0_32 = arith.constant 0 : index
    %41 = vector.load %arg3[%c2, %c0_32] : memref<3x128xf32, #tpu.memory_space<vmem>>, vector<1x128xf32>
    %42 = vector.broadcast %41 : vector<1x128xf32> to vector<8x128xf32>
    %43 = arith.addf %40, %42 : vector<8x128xf32>
    %c0_33 = arith.constant 0 : index
    %c0_34 = arith.constant 0 : index
    %44 = vector.load %arg8[%c0_33, %c0_34] : memref<8x128xf32, #tpu.memory_space<vmem>>, vector<8x128xf32>
    tpu.vector_store %arg8[%c0_33, %c0_34], %43 {strides = array<i32>} : memref<8x128xf32, #tpu.memory_space<vmem>>, vector<8x128xf32>,
    return
  }
  func.func @transform_0(%arg0: i32) -> (i32, i32) {
    %c0_i32 = arith.constant 0 : i32
    %c0_i32_0 = arith.constant 0 : i32
    return %arg0, %c0_i32 : i32, i32
  }
  func.func @transform_1(%arg0: i32) -> (i32, i32) {
    %c0_i32 = arith.constant 0 : i32
    %c0_i32_0 = arith.constant 0 : i32
    %c0_i32_1 = arith.constant 0 : i32
    return %c0_i32, %c0_i32_0 : i32, i32
  }
  func.func @transform_2(%arg0: i32) -> (i32, i32) {
    %c0_i32 = arith.constant 0 : i32
    %c0_i32_0 = arith.constant 0 : i32
    %c0_i32_1 = arith.constant 0 : i32
    return %c0_i32, %c0_i32_0 : i32, i32
  }
  func.func @transform_3(%arg0: i32) -> (i32, i32) {
    %c0_i32 = arith.constant 0 : i32
    %c0_i32_0 = arith.constant 0 : i32
    %c0_i32_1 = arith.constant 0 : i32
    return %c0_i32, %c0_i32_0 : i32, i32
  }
  func.func @transform_4(%arg0: i32) -> (i32, i32) {
    %c0_i32 = arith.constant 0 : i32
    %c0_i32_0 = arith.constant 0 : i32
    %c0_i32_1 = arith.constant 0 : i32
    return %c0_i32, %c0_i32_0 : i32, i32
  }
  func.func @transform_5(%arg0: i32) -> (i32, i32) {
    %c0_i32 = arith.constant 0 : i32
    %c0_i32_0 = arith.constant 0 : i32
    %c0_i32_1 = arith.constant 0 : i32
    return %c0_i32, %c0_i32_0 : i32, i32
  }
  func.func @transform_6(%arg0: i32) -> (i32, i32) {
    %c0_i32 = arith.constant 0 : i32
    %c0_i32_0 = arith.constant 0 : i32
    %c0_i32_1 = arith.constant 0 : i32
    return %c0_i32, %c0_i32_0 : i32, i32
  }
  func.func @transform_7(%arg0: i32) -> (i32, i32) {
    %c0_i32 = arith.constant 0 : i32
    %c0_i32_0 = arith.constant 0 : i32
    return %arg0, %c0_i32 : i32, i32
  }
}

</mosaic_0001>

<llo_original>
// kernel: tile.26
$region0: #{tile.26}
  #allocation0 [shape = 's32[1]{0}', space=sflag, size = 0x4, scoped, tag = 'scoped memory for tile.26']
  %s0 = inlined_call_operand.vmem [shape: f32[32], index: 0, kind: input, shape index: {}]
  %s1 = inlined_call_operand.vmem [shape: f32[4,32], index: 1, kind: output, shape index: {}]
  // Predicated region
  $region2: #{tile.26} parent=0 // pred_check
    _
  $region3: #{tile.26} parent=0 // pred_check_branch
    %3 = sbr.rel (0) target = $region5
  $region4: #{tile.26} parent=0 // pred_region
    _
  $region5: #{tile.26} parent=0 // pred_fallthru
    _
  %v4 = vld [vmem:[%s0] ss:$0 sm:$0xff]
  %5 = vst [vmem:[%s1] sm:$0xf] %v4

// kernel: tile.29
$region0: #{tile.29}
  %s0 = inlined_call_operand.vmem [shape: f32[4,32], index: 0, kind: input, shape index: {}]
  %s1 = inlined_call_operand.vmem [shape: f32[1,128], index: 1, kind: output, shape index: {}]
  $region1: #{tile.29} parent=0
    #allocation0 [shape = 'u8[4096]{0}', space=vmem, size = 0x1000, scoped, tag = 'scoped mem for output reshape']
    #allocation1 [shape = 'u8[4096]{0}', space=vmem, size = 0x1000, scoped, tag = 'scoped mem for input reshape']
    %s3 = ssub.s32 16, 1
    %v4 = vld [vmem:[%s0] sm:%s3]
    %5 = vst [vmem:[#allocation1] sm:%s3] %v4
    %v6 = vld [vmem:[#allocation1] sm:$0x1]
    %vm7 = vcmask 261120
    %8 = vst.msk [vmem:[#allocation0] sm:$0x1] %vm7, %v6
    %s9 = scalar_lea.vmem [#allocation1], 3
    %v10 = vld [vmem:[%s9] sm:$0x1]
    %11 = vrot.lane.b32.xlu0 %v10, 96
    %v12 = vpop.permute.xlu0 %11
    %vm13 = vcmask 1048320
    %14 = vst.msk [vmem:[#allocation0] sm:$0x1] %vm13, %v12
    %s15 = scalar_lea.vmem [#allocation1], 2
    %v16 = vld [vmem:[%s15] sm:$0x1]
    %17 = vrot.lane.b32.xlu0 %v16, 64
    %v18 = vpop.permute.xlu0 %17
    %vm19 = vcmask 785920
    %20 = vst.msk [vmem:[#allocation0] sm:$0x1] %vm19, %v18
    %s21 = scalar_lea.vmem [#allocation1], 1
    %v22 = vld [vmem:[%s21] sm:$0x1]
    %23 = vrot.lane.b32.xlu0 %v22, 32
    %v24 = vpop.permute.xlu0 %23
    %vm25 = vcmask 523520
    %26 = vst.msk [vmem:[#allocation0] sm:$0x1] %vm25, %v24
    %s28 = ssub.s32 2, 1
    %v29 = vld [vmem:[#allocation0] sm:%s28]
    %s31 = ssub.s32 2, 1
    %32 = vst [vmem:[%s1] sm:%s31] %v29

// kernel: patch_embedding.1
$region0: #{patch_embedding.1}
  #allocation0 [shape = 'u32[]', space=smem, size = 0x4, offset = 0x4, fixed_abs, tag = 'smem constant byte address 0x4 - core index']
  #allocation1 [shape = 'u32[72,128]{1,0:T(1,128)}', space=vmem, size = 0x9000, scoped, tag = 'internal scratch']
  %s0 = inlined_call_operand.vmem [shape: f32[8,256], index: 0, kind: input, shape index: {}]
  %s1 = inlined_call_operand.vmem [shape: f32[256,128], index: 1, kind: input, shape index: {}]
  %s2 = inlined_call_operand.vmem [shape: f32[3,128], index: 2, kind: input, shape index: {}]
  %s3 = inlined_call_operand.vmem [shape: f32[256,8], index: 3, kind: input, shape index: {}]
  %s4 = inlined_call_operand.vmem [shape: f32[8,256], index: 4, kind: input, shape index: {}]
  %s5 = inlined_call_operand.vmem [shape: f32[128,8], index: 5, kind: input, shape index: {}]
  %s6 = inlined_call_operand.vmem [shape: f32[8,128], index: 6, kind: input, shape index: {}]
  %s7 = inlined_call_operand.vmem [shape: f32[8,128], index: 7, kind: output, shape index: {}]
  %s8 = sld [smem:[#allocation0]]
  $region38: #{patch_embedding.1} parent=0
    _
  %s10 = ssub.s32 1, %s8
  %s11 = scalar_select 0, %s10, %s8
  // Predicated region
  $region2: #{patch_embedding.1} parent=0 // pred_check
    _
  $region3: #{patch_embedding.1} parent=0 // pred_check_branch
    %13 = sbr.rel (0) target = $region5
  $region4: #{patch_embedding.1} parent=0 // pred_region
    _
  $region5: #{patch_embedding.1} parent=0 // pred_fallthru
    _
  // Predicated region
  $region6: #{patch_embedding.1} parent=0 // pred_check
    _
  $region7: #{patch_embedding.1} parent=0 // pred_check_branch
    %15 = sbr.rel (0) target = $region9
  $region8: #{patch_embedding.1} parent=0 // pred_region
    _
  $region9: #{patch_embedding.1} parent=0 // pred_fallthru
    _
  // Predicated region
  $region10: #{patch_embedding.1} parent=0 // pred_check
    _
  $region11: #{patch_embedding.1} parent=0 // pred_check_branch
    %17 = sbr.rel (0) target = $region13
  $region12: #{patch_embedding.1} parent=0 // pred_region
    _
  $region13: #{patch_embedding.1} parent=0 // pred_fallthru
    _
  // Predicated region
  $region14: #{patch_embedding.1} parent=0 // pred_check
    _
  $region15: #{patch_embedding.1} parent=0 // pred_check_branch
    %19 = sbr.rel (0) target = $region17
  $region16: #{patch_embedding.1} parent=0 // pred_region
    _
  $region17: #{patch_embedding.1} parent=0 // pred_fallthru
    _
  // Predicated region
  $region18: #{patch_embedding.1} parent=0 // pred_check
    _
  $region19: #{patch_embedding.1} parent=0 // pred_check_branch
    %21 = sbr.rel (0) target = $region21
  $region20: #{patch_embedding.1} parent=0 // pred_region
    _
  $region21: #{patch_embedding.1} parent=0 // pred_fallthru
    _
  // Predicated region
  $region22: #{patch_embedding.1} parent=0 // pred_check
    _
  $region23: #{patch_embedding.1} parent=0 // pred_check_branch
    %23 = sbr.rel (0) target = $region25
  $region24: #{patch_embedding.1} parent=0 // pred_region
    _
  $region25: #{patch_embedding.1} parent=0 // pred_fallthru
    _
  // Predicated region
  $region26: #{patch_embedding.1} parent=0 // pred_check
    _
  $region27: #{patch_embedding.1} parent=0 // pred_check_branch
    %25 = sbr.rel (0) target = $region29
  $region28: #{patch_embedding.1} parent=0 // pred_region
    _
  $region29: #{patch_embedding.1} parent=0 // pred_fallthru
    _
  %v26 = vld [vmem:[%s0] sm:$0xff]
  %v27 = vld [vmem:[%s0 + $0x8] sm:$0xff]
  %v28 = vld [vmem:[%s3] sm:$0xff]
  %v29 = vld [vmem:[%s3 + $0x8] sm:$0xff]
  %v30 = vld [vmem:[%s3 + $0x10] sm:$0xff]
  %v31 = vld [vmem:[%s3 + $0x18] sm:$0xff]
  %v32 = vld [vmem:[%s3 + $0x20] sm:$0xff]
  %v33 = vld [vmem:[%s3 + $0x28] sm:$0xff]
  %v34 = vld [vmem:[%s3 + $0x30] sm:$0xff]
  %v35 = vld [vmem:[%s3 + $0x38] sm:$0xff]
  %v36 = vld [vmem:[%s3 + $0x40] sm:$0xff]
  %v37 = vld [vmem:[%s3 + $0x48] sm:$0xff]
  %v38 = vld [vmem:[%s3 + $0x50] sm:$0xff]
  %v39 = vld [vmem:[%s3 + $0x58] sm:$0xff]
  %v40 = vld [vmem:[%s3 + $0x60] sm:$0xff]
  %v41 = vld [vmem:[%s3 + $0x68] sm:$0xff]
  %v42 = vld [vmem:[%s3 + $0x70] sm:$0xff]
  %v43 = vld [vmem:[%s3 + $0x78] sm:$0xff]
  %v44 = vld [vmem:[%s3 + $0x80] sm:$0xff]
  %v45 = vld [vmem:[%s3 + $0x88] sm:$0xff]
  %v46 = vld [vmem:[%s3 + $0x90] sm:$0xff]
  %v47 = vld [vmem:[%s3 + $0x98] sm:$0xff]
  %v48 = vld [vmem:[%s3 + $0xa0] sm:$0xff]
  %v49 = vld [vmem:[%s3 + $0xa8] sm:$0xff]
  %v50 = vld [vmem:[%s3 + $0xb0] sm:$0xff]
  %v51 = vld [vmem:[%s3 + $0xb8] sm:$0xff]
  %v52 = vld [vmem:[%s3 + $0xc0] sm:$0xff]
  %v53 = vld [vmem:[%s3 + $0xc8] sm:$0xff]
  %v54 = vld [vmem:[%s3 + $0xd0] sm:$0xff]
  %v55 = vld [vmem:[%s3 + $0xd8] sm:$0xff]
  %v56 = vld [vmem:[%s3 + $0xe0] sm:$0xff]
  %v57 = vld [vmem:[%s3 + $0xe8] sm:$0xff]
  %v58 = vld [vmem:[%s3 + $0xf0] sm:$0xff]
  %v59 = vld [vmem:[%s3 + $0xf8] sm:$0xff]
  %60 = vmatpush.msra.mxu0 %v43
  %61 = vmatpush.msra.mxu0 %v42
  %62 = vmatpush.msra.mxu0 %v41
  %63 = vmatpush.msra.mxu0 %v40
  %64 = vmatpush.msra.mxu0 %v39
  %65 = vmatpush.msra.mxu0 %v38
  %66 = vmatpush.msra.mxu0 %v37
  %67 = vmatpush.msra.mxu0 %v36
  %68 = vmatpush.msra.mxu0 %v35
  %69 = vmatpush.msra.mxu0 %v34
  %70 = vmatpush.msra.mxu0 %v33
  %71 = vmatpush.msra.mxu0 %v32
  %72 = vmatpush.msra.mxu0 %v31
  %73 = vmatpush.msra.mxu0 %v30
  %74 = vmatpush.msra.mxu0 %v29
  %75 = vmatpush.msra.mxu0 %v28
  %76 = vmatmul.f32.gmra.mxu0 %v26
  %v77 = vpop.f32.mrf.mxu0
  %v78 = vadd.f32 0.0, %v77
  %79 = vdwg.mxu0
  %80 = vmatpush.msra.mxu0 %v59
  %81 = vmatpush.msra.mxu0 %v58
  %82 = vmatpush.msra.mxu0 %v57
  %83 = vmatpush.msra.mxu0 %v56
  %84 = vmatpush.msra.mxu0 %v55
  %85 = vmatpush.msra.mxu0 %v54
  %86 = vmatpush.msra.mxu0 %v53
  %87 = vmatpush.msra.mxu0 %v52
  %88 = vmatpush.msra.mxu0 %v51
  %89 = vmatpush.msra.mxu0 %v50
  %90 = vmatpush.msra.mxu0 %v49
  %91 = vmatpush.msra.mxu0 %v48
  %92 = vmatpush.msra.mxu0 %v47
  %93 = vmatpush.msra.mxu0 %v46
  %94 = vmatpush.msra.mxu0 %v45
  %95 = vmatpush.msra.mxu0 %v44
  %96 = vmatmul.f32.gmra.mxu0 %v27
  %v97 = vpop.f32.mrf.mxu0
  %v98 = vadd.f32 %v78, %v97
  %99 = vdwg.mxu0
  %v100 = vmul.f32 %v26, %v26
  %v101 = vmul.f32 %v27, %v27
  %102 = vmatpush.msra.mxu0 %v43
  %103 = vmatpush.msra.mxu0 %v42
  %104 = vmatpush.msra.mxu0 %v41
  %105 = vmatpush.msra.mxu0 %v40
  %106 = vmatpush.msra.mxu0 %v39
  %107 = vmatpush.msra.mxu0 %v38
  %108 = vmatpush.msra.mxu0 %v37
  %109 = vmatpush.msra.mxu0 %v36
  %110 = vmatpush.msra.mxu0 %v35
  %111 = vmatpush.msra.mxu0 %v34
  %112 = vmatpush.msra.mxu0 %v33
  %113 = vmatpush.msra.mxu0 %v32
  %114 = vmatpush.msra.mxu0 %v31
  %115 = vmatpush.msra.mxu0 %v30
  %116 = vmatpush.msra.mxu0 %v29
  %117 = vmatpush.msra.mxu0 %v28
  %118 = vmatmul.f32.gmra.mxu0 %v100
  %v119 = vpop.f32.mrf.mxu0
  %v120 = vadd.f32 0.0, %v119
  %121 = vdwg.mxu0
  %122 = vmatpush.msra.mxu0 %v59
  %123 = vmatpush.msra.mxu0 %v58
  %124 = vmatpush.msra.mxu0 %v57
  %125 = vmatpush.msra.mxu0 %v56
  %126 = vmatpush.msra.mxu0 %v55
  %127 = vmatpush.msra.mxu0 %v54
  %128 = vmatpush.msra.mxu0 %v53
  %129 = vmatpush.msra.mxu0 %v52
  %130 = vmatpush.msra.mxu0 %v51
  %131 = vmatpush.msra.mxu0 %v50
  %132 = vmatpush.msra.mxu0 %v49
  %133 = vmatpush.msra.mxu0 %v48
  %134 = vmatpush.msra.mxu0 %v47
  %135 = vmatpush.msra.mxu0 %v46
  %136 = vmatpush.msra.mxu0 %v45
  %137 = vmatpush.msra.mxu0 %v44
  %138 = vmatmul.f32.gmra.mxu0 %v101
  %v139 = vpop.f32.mrf.mxu0
  %v140 = vadd.f32 %v120, %v139
  %141 = vdwg.mxu0
  %v142 = vld [vmem:[%s4] sm:$0xff]
  %v143 = vld [vmem:[%s4 + $0x8] sm:$0xff]
  %vm144 = vcmask 64512
  %v146 = vsel %vm144, %v98, 0
  %148 = vmatpush.msra.mxu0 0.0
  %149 = vmatpush.msra.mxu0 0.0
  %150 = vmatpush.msra.mxu0 0.0
  %151 = vmatpush.msra.mxu0 0.0
  %152 = vmatpush.msra.mxu0 0.0
  %153 = vmatpush.msra.mxu0 0.0
  %154 = vmatpush.msra.mxu0 0.0
  %155 = vmatpush.msra.mxu0 0.0
  %156 = vmatpush.msra.mxu0 0.0
  %157 = vmatpush.msra.mxu0 0.0
  %158 = vmatpush.msra.mxu0 0.0
  %159 = vmatpush.msra.mxu0 0.0
  %160 = vmatpush.msra.mxu0 0.0
  %161 = vmatpush.msra.mxu0 0.0
  %162 = vmatpush.msra.mxu0 0.0
  %163 = vmatpush.msra.mxu0 %v142
  %164 = vmatmul.f32.gmra.mxu0 %v146
  %v165 = vpop.f32.mrf.mxu0
  %v166 = vadd.f32 0.0, %v165
  %167 = vdwg.mxu0
  %168 = vmatpush.msra.mxu0 0.0
  %169 = vmatpush.msra.mxu0 0.0
  %170 = vmatpush.msra.mxu0 0.0
  %171 = vmatpush.msra.mxu0 0.0
  %172 = vmatpush.msra.mxu0 0.0
  %173 = vmatpush.msra.mxu0 0.0
  %174 = vmatpush.msra.mxu0 0.0
  %175 = vmatpush.msra.mxu0 0.0
  %176 = vmatpush.msra.mxu0 0.0
  %177 = vmatpush.msra.mxu0 0.0
  %178 = vmatpush.msra.mxu0 0.0
  %179 = vmatpush.msra.mxu0 0.0
  %180 = vmatpush.msra.mxu0 0.0
  %181 = vmatpush.msra.mxu0 0.0
  %182 = vmatpush.msra.mxu0 0.0
  %183 = vmatpush.msra.mxu0 %v143
  %184 = vmatmul.f32.gmra.mxu0 %v146
  %v185 = vpop.f32.mrf.mxu0
  %v186 = vadd.f32 0.0, %v185
  %187 = vdwg.mxu0
  %v189 = vsel %vm144, %v140, 0
  %191 = vmatpush.msra.mxu0 0.0
  %192 = vmatpush.msra.mxu0 0.0
  %193 = vmatpush.msra.mxu0 0.0
  %194 = vmatpush.msra.mxu0 0.0
  %195 = vmatpush.msra.mxu0 0.0
  %196 = vmatpush.msra.mxu0 0.0
  %197 = vmatpush.msra.mxu0 0.0
  %198 = vmatpush.msra.mxu0 0.0
  %199 = vmatpush.msra.mxu0 0.0
  %200 = vmatpush.msra.mxu0 0.0
  %201 = vmatpush.msra.mxu0 0.0
  %202 = vmatpush.msra.mxu0 0.0
  %203 = vmatpush.msra.mxu0 0.0
  %204 = vmatpush.msra.mxu0 0.0
  %205 = vmatpush.msra.mxu0 0.0
  %206 = vmatpush.msra.mxu0 %v142
  %207 = vmatmul.f32.gmra.mxu0 %v189
  %v208 = vpop.f32.mrf.mxu0
  %v209 = vadd.f32 0.0, %v208
  %210 = vdwg.mxu0
  %211 = vmatpush.msra.mxu0 0.0
  %212 = vmatpush.msra.mxu0 0.0
  %213 = vmatpush.msra.mxu0 0.0
  %214 = vmatpush.msra.mxu0 0.0
  %215 = vmatpush.msra.mxu0 0.0
  %216 = vmatpush.msra.mxu0 0.0
  %217 = vmatpush.msra.mxu0 0.0
  %218 = vmatpush.msra.mxu0 0.0
  %219 = vmatpush.msra.mxu0 0.0
  %220 = vmatpush.msra.mxu0 0.0
  %221 = vmatpush.msra.mxu0 0.0
  %222 = vmatpush.msra.mxu0 0.0
  %223 = vmatpush.msra.mxu0 0.0
  %224 = vmatpush.msra.mxu0 0.0
  %225 = vmatpush.msra.mxu0 0.0
  %226 = vmatpush.msra.mxu0 %v143
  %227 = vmatmul.f32.gmra.mxu0 %v189
  %v228 = vpop.f32.mrf.mxu0
  %v229 = vadd.f32 0.0, %v228
  %230 = vdwg.mxu0
  %v231 = vmul.f32 %v166, %v166
  %v232 = vmul.f32 %v186, %v186
  %v233 = vsub.f32 %v209, %v231
  %v234 = vsub.f32 %v229, %v232
  %v235 = vsub.f32 %v26, %v166
  %v236 = vsub.f32 %v27, %v186
  %v237 = vadd.f32 %v233, 1e-05
  %v238 = vadd.f32 %v234, 1e-05
  %v239 = vrsqrt.pop %v237
  %v240 = vmul.f32 %v239, %v237
  %v241 = vmul.f32 %v240, %v239
  %v242 = vmul.f32 0.5, %v241
  %v243 = vsub.f32 1.5, %v242
  %v244 = vmul.f32 %v239, %v243
  %vm245 = vweird.f32 %v237
  %vm246 = vweird.f32 %v239
  %vm247 = vmor %vm245, %vm246
  %v248 = vsel %vm247, %v239, %v244
  %v249 = vrsqrt.pop %v238
  %v250 = vmul.f32 %v249, %v238
  %v251 = vmul.f32 %v250, %v249
  %v252 = vmul.f32 0.5, %v251
  %v253 = vsub.f32 1.5, %v252
  %v254 = vmul.f32 %v249, %v253
  %vm255 = vweird.f32 %v238
  %vm256 = vweird.f32 %v249
  %vm257 = vmor %vm255, %vm256
  %v258 = vsel %vm257, %v249, %v254
  %v259 = vmul.f32 %v235, %v248
  %v260 = vmul.f32 %v236, %v258
  %v261 = vld [vmem:[%s1] sm:$0xff]
  %v262 = vld [vmem:[%s1 + $0x8] sm:$0xff]
  %v263 = vld [vmem:[%s1 + $0x10] sm:$0xff]
  %v264 = vld [vmem:[%s1 + $0x18] sm:$0xff]
  %v265 = vld [vmem:[%s1 + $0x20] sm:$0xff]
  %v266 = vld [vmem:[%s1 + $0x28] sm:$0xff]
  %v267 = vld [vmem:[%s1 + $0x30] sm:$0xff]
  %v268 = vld [vmem:[%s1 + $0x38] sm:$0xff]
  %v269 = vld [vmem:[%s1 + $0x40] sm:$0xff]
  %v270 = vld [vmem:[%s1 + $0x48] sm:$0xff]
  %v271 = vld [vmem:[%s1 + $0x50] sm:$0xff]
  %v272 = vld [vmem:[%s1 + $0x58] sm:$0xff]
  %v273 = vld [vmem:[%s1 + $0x60] sm:$0xff]
  %v274 = vld [vmem:[%s1 + $0x68] sm:$0xff]
  %v275 = vld [vmem:[%s1 + $0x70] sm:$0xff]
  %v276 = vld [vmem:[%s1 + $0x78] sm:$0xff]
  %v277 = vld [vmem:[%s1 + $0x80] sm:$0xff]
  %v278 = vld [vmem:[%s1 + $0x88] sm:$0xff]
  %v279 = vld [vmem:[%s1 + $0x90] sm:$0xff]
  %v280 = vld [vmem:[%s1 + $0x98] sm:$0xff]
  %v281 = vld [vmem:[%s1 + $0xa0] sm:$0xff]
  %v282 = vld [vmem:[%s1 + $0xa8] sm:$0xff]
  %v283 = vld [vmem:[%s1 + $0xb0] sm:$0xff]
  %v284 = vld [vmem:[%s1 + $0xb8] sm:$0xff]
  %v285 = vld [vmem:[%s1 + $0xc0] sm:$0xff]
  %v286 = vld [vmem:[%s1 + $0xc8] sm:$0xff]
  %v287 = vld [vmem:[%s1 + $0xd0] sm:$0xff]
  %v288 = vld [vmem:[%s1 + $0xd8] sm:$0xff]
  %v289 = vld [vmem:[%s1 + $0xe0] sm:$0xff]
  %v290 = vld [vmem:[%s1 + $0xe8] sm:$0xff]
  %v291 = vld [vmem:[%s1 + $0xf0] sm:$0xff]
  %v292 = vld [vmem:[%s1 + $0xf8] sm:$0xff]
  %v293 = vld [vmem:[%s2] sm:$0x1]
  %v294 = vperm.slane %v293, 0
  %295 = vmatpush.msra.mxu0 %v276
  %296 = vmatpush.msra.mxu0 %v275
  %297 = vmatpush.msra.mxu0 %v274
  %298 = vmatpush.msra.mxu0 %v273
  %299 = vmatpush.msra.mxu0 %v272
  %300 = vmatpush.msra.mxu0 %v271
  %301 = vmatpush.msra.mxu0 %v270
  %302 = vmatpush.msra.mxu0 %v269
  %303 = vmatpush.msra.mxu0 %v268
  %304 = vmatpush.msra.mxu0 %v267
  %305 = vmatpush.msra.mxu0 %v266
  %306 = vmatpush.msra.mxu0 %v265
  %307 = vmatpush.msra.mxu0 %v264
  %308 = vmatpush.msra.mxu0 %v263
  %309 = vmatpush.msra.mxu0 %v262
  %310 = vmatpush.msra.mxu0 %v261
  %311 = vmatmul.f32.gmra.mxu0 %v259
  %v312 = vpop.f32.mrf.mxu0
  %v313 = vadd.f32 %v294, %v312
  %314 = vdwg.mxu0
  %315 = vmatpush.msra.mxu0 %v292
  %316 = vmatpush.msra.mxu0 %v291
  %317 = vmatpush.msra.mxu0 %v290
  %318 = vmatpush.msra.mxu0 %v289
  %319 = vmatpush.msra.mxu0 %v288
  %320 = vmatpush.msra.mxu0 %v287
  %321 = vmatpush.msra.mxu0 %v286
  %322 = vmatpush.msra.mxu0 %v285
  %323 = vmatpush.msra.mxu0 %v284
  %324 = vmatpush.msra.mxu0 %v283
  %325 = vmatpush.msra.mxu0 %v282
  %326 = vmatpush.msra.mxu0 %v281
  %327 = vmatpush.msra.mxu0 %v280
  %328 = vmatpush.msra.mxu0 %v279
  %329 = vmatpush.msra.mxu0 %v278
  %330 = vmatpush.msra.mxu0 %v277
  %331 = vmatmul.f32.gmra.mxu0 %v260
  %v332 = vpop.f32.mrf.mxu0
  %v333 = vadd.f32 %v313, %v332
  %334 = vdwg.mxu0
  %v335 = vld [vmem:[%s5] sm:$0xff]
  %v336 = vld [vmem:[%s5 + $0x8] sm:$0xff]
  %v337 = vld [vmem:[%s5 + $0x10] sm:$0xff]
  %v338 = vld [vmem:[%s5 + $0x18] sm:$0xff]
  %v339 = vld [vmem:[%s5 + $0x20] sm:$0xff]
  %v340 = vld [vmem:[%s5 + $0x28] sm:$0xff]
  %v341 = vld [vmem:[%s5 + $0x30] sm:$0xff]
  %v342 = vld [vmem:[%s5 + $0x38] sm:$0xff]
  %v343 = vld [vmem:[%s5 + $0x40] sm:$0xff]
  %v344 = vld [vmem:[%s5 + $0x48] sm:$0xff]
  %v345 = vld [vmem:[%s5 + $0x50] sm:$0xff]
  %v346 = vld [vmem:[%s5 + $0x58] sm:$0xff]
  %v347 = vld [vmem:[%s5 + $0x60] sm:$0xff]
  %v348 = vld [vmem:[%s5 + $0x68] sm:$0xff]
  %v349 = vld [vmem:[%s5 + $0x70] sm:$0xff]
  %v350 = vld [vmem:[%s5 + $0x78] sm:$0xff]
  %351 = vmatpush.msra.mxu0 %v350
  %352 = vmatpush.msra.mxu0 %v349
  %353 = vmatpush.msra.mxu0 %v348
  %354 = vmatpush.msra.mxu0 %v347
  %355 = vmatpush.msra.mxu0 %v346
  %356 = vmatpush.msra.mxu0 %v345
  %357 = vmatpush.msra.mxu0 %v344
  %358 = vmatpush.msra.mxu0 %v343
  %359 = vmatpush.msra.mxu0 %v342
  %360 = vmatpush.msra.mxu0 %v341
  %361 = vmatpush.msra.mxu0 %v340
  %362 = vmatpush.msra.mxu0 %v339
  %363 = vmatpush.msra.mxu0 %v338
  %364 = vmatpush.msra.mxu0 %v337
  %365 = vmatpush.msra.mxu0 %v336
  %366 = vmatpush.msra.mxu0 %v335
  %367 = vmatmul.f32.gmra.mxu0 %v333
  %v368 = vpop.f32.mrf.mxu0
  %v369 = vadd.f32 0.0, %v368
  %370 = vdwg.mxu0
  %v371 = vmul.f32 %v333, %v333
  %372 = vmatpush.msra.mxu0 %v350
  %373 = vmatpush.msra.mxu0 %v349
  %374 = vmatpush.msra.mxu0 %v348
  %375 = vmatpush.msra.mxu0 %v347
  %376 = vmatpush.msra.mxu0 %v346
  %377 = vmatpush.msra.mxu0 %v345
  %378 = vmatpush.msra.mxu0 %v344
  %379 = vmatpush.msra.mxu0 %v343
  %380 = vmatpush.msra.mxu0 %v342
  %381 = vmatpush.msra.mxu0 %v341
  %382 = vmatpush.msra.mxu0 %v340
  %383 = vmatpush.msra.mxu0 %v339
  %384 = vmatpush.msra.mxu0 %v338
  %385 = vmatpush.msra.mxu0 %v337
  %386 = vmatpush.msra.mxu0 %v336
  %387 = vmatpush.msra.mxu0 %v335
  %388 = vmatmul.f32.gmra.mxu0 %v371
  %v389 = vpop.f32.mrf.mxu0
  %v390 = vadd.f32 0.0, %v389
  %391 = vdwg.mxu0
  %v392 = vld [vmem:[%s6] sm:$0xff]
  %v394 = vsel %vm144, %v369, 0
  %396 = vmatpush.msra.mxu0 0.0
  %397 = vmatpush.msra.mxu0 0.0
  %398 = vmatpush.msra.mxu0 0.0
  %399 = vmatpush.msra.mxu0 0.0
  %400 = vmatpush.msra.mxu0 0.0
  %401 = vmatpush.msra.mxu0 0.0
  %402 = vmatpush.msra.mxu0 0.0
  %403 = vmatpush.msra.mxu0 0.0
  %404 = vmatpush.msra.mxu0 0.0
  %405 = vmatpush.msra.mxu0 0.0
  %406 = vmatpush.msra.mxu0 0.0
  %407 = vmatpush.msra.mxu0 0.0
  %408 = vmatpush.msra.mxu0 0.0
  %409 = vmatpush.msra.mxu0 0.0
  %410 = vmatpush.msra.mxu0 0.0
  %411 = vmatpush.msra.mxu0 %v392
  %412 = vmatmul.f32.gmra.mxu0 %v394
  %v413 = vpop.f32.mrf.mxu0
  %v414 = vadd.f32 0.0, %v413
  %415 = vdwg.mxu0
  %v417 = vsel %vm144, %v390, 0
  %419 = vmatpush.msra.mxu0 0.0
  %420 = vmatpush.msra.mxu0 0.0
  %421 = vmatpush.msra.mxu0 0.0
  %422 = vmatpush.msra.mxu0 0.0
  %423 = vmatpush.msra.mxu0 0.0
  %424 = vmatpush.msra.mxu0 0.0
  %425 = vmatpush.msra.mxu0 0.0
  %426 = vmatpush.msra.mxu0 0.0
  %427 = vmatpush.msra.mxu0 0.0
  %428 = vmatpush.msra.mxu0 0.0
  %429 = vmatpush.msra.mxu0 0.0
  %430 = vmatpush.msra.mxu0 0.0
  %431 = vmatpush.msra.mxu0 0.0
  %432 = vmatpush.msra.mxu0 0.0
  %433 = vmatpush.msra.mxu0 0.0
  %434 = vmatpush.msra.mxu0 %v392
  %435 = vmatmul.f32.gmra.mxu0 %v417
  %v436 = vpop.f32.mrf.mxu0
  %v437 = vadd.f32 0.0, %v436
  %438 = vdwg.mxu0
  %v439 = vmul.f32 %v414, %v414
  %v440 = vsub.f32 %v437, %v439
  %v441 = vsub.f32 %v333, %v414
  %v442 = vadd.f32 %v440, 1e-05
  %v443 = vrsqrt.pop %v442
  %v444 = vmul.f32 %v443, %v442
  %v445 = vmul.f32 %v444, %v443
  %v446 = vmul.f32 0.5, %v445
  %v447 = vsub.f32 1.5, %v446
  %v448 = vmul.f32 %v443, %v447
  %vm449 = vweird.f32 %v442
  %vm450 = vweird.f32 %v443
  %vm451 = vmor %vm449, %vm450
  %v452 = vsel %vm451, %v443, %v448
  %v453 = vmul.f32 %v441, %v452
  %v454 = vld [vmem:[%s2 + $0x1] sm:$0x1]
  %v455 = vperm.slane %v454, 0
  %v456 = vmul.f32 %v453, %v455
  %v457 = vld [vmem:[%s2 + $0x2] sm:$0x1]
  %v458 = vperm.slane %v457, 0
  %v459 = vadd.f32 %v456, %v458
  %460 = vst [vmem:[%s7] sm:$0xff] %v459
  // Predicated region
  $region30: #{patch_embedding.1} parent=0 // pred_check
    _
  $region31: #{patch_embedding.1} parent=0 // pred_check_branch
    %462 = sbr.rel (0) target = $region33
  $region32: #{patch_embedding.1} parent=0 // pred_region
    _
  $region33: #{patch_embedding.1} parent=0 // pred_fallthru
    _
  // Predicated region
  $region34: #{patch_embedding.1} parent=0 // pred_check
    _
  $region35: #{patch_embedding.1} parent=0 // pred_check_branch
    %464 = sbr.rel (0) target = $region37
  $region36: #{patch_embedding.1} parent=0 // pred_region
    _
  $region37: #{patch_embedding.1} parent=0 // pred_fallthru
    _

</llo_original>
